<compile_context>
chip_gen: v7x
topology: tpu7x:2x2x1
jax: 0.10.0
libtpu: 0.0.40
codegen_flags: <defaults>
</compile_context>

<pallas_src>
import functools

import jax
import jax.numpy as jnp
from jax.experimental import pallas as pl
from jax.experimental.pallas import tpu as pltpu


# ---------------- numerically stable log-softmax helpers (f32 values) ----------------

def _log_softmax_axis0(x):
    """log_softmax over rows (axis 0), per column."""
    m = jnp.max(x, axis=0, keepdims=True)
    s = x - m
    return s - jnp.log(jnp.sum(jnp.exp(s), axis=0, keepdims=True))


def _log_softmax_axis1(x):
    """log_softmax over the lane axis (axis 1), per row."""
    m = jnp.max(x, axis=1, keepdims=True)
    s = x - m
    return s - jnp.log(jnp.sum(jnp.exp(s), axis=1, keepdims=True))


# ---------------- kernels ----------------

def _ti_compute(ti_ref, ti_out_ref):
    """Packed transition+init slab: rows [0:T] transition (reduce over rows),
    row [T] init (reduce over the T lane entries)."""
    T = ti_ref.shape[1]
    tr = _log_softmax_axis0(ti_ref[pl.ds(0, T), :].astype(jnp.float32))
    init_row = _log_softmax_axis1(ti_ref[pl.ds(T, 1), :].astype(jnp.float32))
    ti_out_ref[pl.ds(0, T), :] = tr.astype(ti_out_ref.dtype)
    ti_out_ref[pl.ds(T, 1), :] = init_row.astype(ti_out_ref.dtype)


def _fused_small_kernel(ti_ref, em_ref, ti_out_ref, em_out_ref):
    """Grid-less fused kernel: packed transition+init slab AND the whole
    emission table (lane-dense (T, V) output)."""
    _ti_compute(ti_ref, ti_out_ref)
    em_out_ref[...] = _log_softmax_axis1(
        em_ref[...].astype(jnp.float32)).astype(em_out_ref.dtype)


def _ti_kernel(ti_ref, ti_out_ref):
    _ti_compute(ti_ref, ti_out_ref)


def _emission_lse_kernel(em_ref, lse_ref, m_sc, l_sc):
    """Pass 1: online per-row max / sum-exp over V tiles; writes logsumexp (T, 1)."""
    j = pl.program_id(0)

    @pl.when(j == 0)
    def _():
        m_sc[...] = jnp.full(m_sc.shape, -jnp.inf, dtype=m_sc.dtype)
        l_sc[...] = jnp.zeros(l_sc.shape, dtype=l_sc.dtype)

    x = em_ref[...].astype(jnp.float32)
    m_new = jnp.maximum(m_sc[...], jnp.max(x, axis=1, keepdims=True))
    l_sc[...] = (l_sc[...] * jnp.exp(m_sc[...] - m_new)
                 + jnp.sum(jnp.exp(x - m_new), axis=1, keepdims=True))
    m_sc[...] = m_new

    @pl.when(j == pl.num_programs(0) - 1)
    def _():
        lse_ref[...] = m_sc[...] + jnp.log(l_sc[...])


def _emission_normalize_kernel(em_ref, lse_ref, out_ref):
    """Pass 2: out = x - logsumexp, written lane-dense per V tile."""
    out_ref[...] = (em_ref[...].astype(jnp.float32) - lse_ref[...]).astype(out_ref.dtype)


# ---------------- pallas_call wrappers ----------------

_VMEM = pltpu.MemorySpace.VMEM
# Grid-less whole-table residency only when emission in+out stays comfortably
# under v5e's 16 MiB default scoped-VMEM limit (and v7x's 64 MiB physical).
_GRIDLESS_EMISSION_BUDGET = 8 * 1024 * 1024
_DEFAULT_TILE_V_TARGET = 4096


def _pick_tile_v(V, target=_DEFAULT_TILE_V_TARGET):
    """Largest multiple of 128 that divides V and is <= target (None if impossible)."""
    if V % 128 != 0:
        return None
    t = (min(V, target) // 128) * 128
    while t >= 128:
        if V % t == 0:
            return t
        t -= 128
    return None


def _run_fused_small(ti_packed, emission_w, out_dtype, *, vmem_limit_bytes=None):
    Tp1, T = ti_packed.shape
    V = emission_w.shape[1]
    compiler_params = None
    if vmem_limit_bytes is not None:
        compiler_params = pltpu.CompilerParams(vmem_limit_bytes=int(vmem_limit_bytes))
    return pl.pallas_call(
        _fused_small_kernel,
        out_shape=(
            jax.ShapeDtypeStruct((Tp1, T), out_dtype),   # packed transition+init
            jax.ShapeDtypeStruct((T, V), out_dtype),     # emission, lane-dense
        ),
        in_specs=[
            pl.BlockSpec(memory_space=_VMEM),
            pl.BlockSpec(memory_space=_VMEM),
        ],
        out_specs=(
            pl.BlockSpec(memory_space=_VMEM),
            pl.BlockSpec(memory_space=_VMEM),
        ),
        compiler_params=compiler_params,
    )(ti_packed, emission_w)


def _run_ti(ti_packed, out_dtype):
    Tp1, T = ti_packed.shape
    return pl.pallas_call(
        _ti_kernel,
        out_shape=jax.ShapeDtypeStruct((Tp1, T), out_dtype),
        in_specs=[pl.BlockSpec(memory_space=_VMEM)],
        out_specs=pl.BlockSpec(memory_space=_VMEM),
    )(ti_packed)


def _run_emission_tiled(emission_w, tile_v, out_dtype):
    T, V = emission_w.shape
    n_v = V // tile_v

    # Pass 1: per-row logsumexp (V axis is the reduction -> "arbitrary").
    lse = pl.pallas_call(
        _emission_lse_kernel,
        out_shape=jax.ShapeDtypeStruct((T, 1), jnp.float32),
        grid_spec=pltpu.PrefetchScalarGridSpec(
            num_scalar_prefetch=0,
            grid=(n_v,),
            in_specs=[pl.BlockSpec((T, tile_v), lambda j: (0, j))],
            out_specs=pl.BlockSpec((T, 1), lambda j: (0, 0)),
            scratch_shapes=[pltpu.VMEM((T, 1), jnp.float32),
                            pltpu.VMEM((T, 1), jnp.float32)],
        ),
        compiler_params=pltpu.CompilerParams(dimension_semantics=("arbitrary",)),
    )(emission_w)

    # Pass 2: normalize and write lane-dense (T, V) tiles; V axis independent ->
    # "parallel" so both v7x TensorCores split the work.
    em_tv = pl.pallas_call(
        _emission_normalize_kernel,
        out_shape=jax.ShapeDtypeStruct((T, V), out_dtype),
        grid_spec=pltpu.PrefetchScalarGridSpec(
            num_scalar_prefetch=0,
            grid=(n_v,),
            in_specs=[pl.BlockSpec((T, tile_v), lambda j: (0, j)),
                      pl.BlockSpec((T, 1), lambda j: (0, 0))],
            out_specs=pl.BlockSpec((T, tile_v), lambda j: (0, j)),
        ),
        compiler_params=pltpu.CompilerParams(dimension_semantics=("parallel",)),
    )(emission_w, lse)
    return em_tv


def hmm_log_softmax(transition_w, emission_w, init_w, *,
                    out_dtype=None, force_tiled_emission=False,
                    emission_tile_v=None):
    """Returns (emission_probs (V,T), transition_probs (T,T), init_probs (T,1))."""
    T, V = emission_w.shape
    out_dtype = out_dtype or emission_w.dtype  # pass jnp.bfloat16 to halve writeback at large V

    if emission_tile_v is not None:
        if emission_tile_v % 128 != 0 or V % emission_tile_v != 0:
            raise ValueError("emission_tile_v must be a multiple of 128 that divides V")

    # Pack transition (T,T) + init (1,T) into one (T+1, T) slab: one fetch DMA
    # and one writeback DMA instead of two each (both are pure fixed overhead
    # at HMM table sizes).
    ti_packed = jnp.concatenate([transition_w, init_w], axis=0)

    em_bytes = T * V * (jnp.dtype(emission_w.dtype).itemsize
                        + jnp.dtype(out_dtype).itemsize)
    tile_v = emission_tile_v if emission_tile_v is not None else _pick_tile_v(V)
    use_tiled = (force_tiled_emission or em_bytes > _GRIDLESS_EMISSION_BUDGET) \
        and tile_v is not None

    if not use_tiled:
        vmem_limit = None
        if em_bytes > 12 * 1024 * 1024:
            # Large but untileable (V not a multiple of 128): keep whole-table
            # residency and raise the scoped-VMEM limit explicitly (v5e default
            # is 16 MiB despite 128 MiB physical).
            # TODO(synk): on v7x (64 MiB physical VMEM) pad V to a multiple of
            # 128 with -inf and take the tiled path instead.
            vmem_limit = min(2 * em_bytes + (4 << 20), 64 << 20)
        ti_out, em_tv = _run_fused_small(ti_packed, emission_w, out_dtype,
                                         vmem_limit_bytes=vmem_limit)
    else:
        ti_out = _run_ti(ti_packed, out_dtype)
        em_tv = _run_emission_tiled(emission_w, tile_v, out_dtype)

    transition_probs = ti_out[:T, :]
    init_probs = ti_out[T, :].reshape(T, 1)
    # em_tv is lane-dense (T, V); present the module's (V, T) view via a
    # wrapper-side transpose (or let downstream read it transposed).
    emission_probs = em_tv.T
    return emission_probs, transition_probs, init_probs


@jax.jit
def model_forward(emission_w, transition_w, init_w):
    """Mirrors Model.forward(): (emission_probs, transition_probs, init_probs, embedding)."""
    emission_probs, transition_probs, init_probs = hmm_log_softmax(
        transition_w, emission_w, init_w)
    voc_size = emission_w.shape[1]
    # Frozen identity embedding built from iota on the fly (never a stored param).
    # TODO(synk): keep this symbolic for identity lookups at realistic V.
    embedding = jnp.eye(voc_size, dtype=emission_w.dtype)
    return emission_probs, transition_probs, init_probs, embedding


if __name__ == "__main__":
    # ---- check 1: toy HMM sizes -> single fused grid-less kernel ----
    voc_size, num_pos_tags = 32, 8
    key = jax.random.PRNGKey(0)
    k_em, k_tr, k_in = jax.random.split(key, 3)
    emission_w = jax.random.uniform(k_em, (num_pos_tags, voc_size), jnp.float32,
                                    minval=-0.5, maxval=0.5)
    transition_w = jax.random.uniform(k_tr, (num_pos_tags, num_pos_tags), jnp.float32,
                                      minval=-0.5, maxval=0.5)
    init_w = jax.random.uniform(k_in, (1, num_pos_tags), jnp.float32,
                                minval=-0.5, maxval=0.5)

    em_p, tr_p, in_p, emb = jax.block_until_ready(
        model_forward(emission_w, transition_w, init_w))

    ref_tr = jax.nn.log_softmax(transition_w, axis=0)
    ref_em = jax.nn.log_softmax(emission_w.T, axis=0)
    ref_in = jax.nn.log_softmax(init_w.T, axis=0)
    assert em_p.shape == (voc_size, num_pos_tags)
    assert tr_p.shape == (num_pos_tags, num_pos_tags)
    assert in_p.shape == (num_pos_tags, 1)
    assert emb.shape == (voc_size, voc_size)
    assert jnp.allclose(tr_p, ref_tr, atol=1e-5)
    assert jnp.allclose(em_p, ref_em, atol=1e-5)
    assert jnp.allclose(in_p, ref_in, atol=1e-5)
    assert jnp.allclose(emb, jnp.eye(voc_size, dtype=jnp.float32))

    # ---- check 2: exercise the tiled two-pass emission path (realistic-V layout) ----
    V2, T2, tile = 1024, 16, 256
    k2 = jax.random.PRNGKey(1)
    k_em2, k_tr2, k_in2 = jax.random.split(k2, 3)
    emission_w2 = jax.random.uniform(k_em2, (T2, V2), jnp.float32, minval=-1.0, maxval=1.0)
    transition_w2 = jax.random.uniform(k_tr2, (T2, T2), jnp.float32, minval=-1.0, maxval=1.0)
    init_w2 = jax.random.uniform(k_in2, (1, T2), jnp.float32, minval=-1.0, maxval=1.0)

    tiled_fwd = jax.jit(functools.partial(hmm_log_softmax,
                                          force_tiled_emission=True,
                                          emission_tile_v=tile))
    em_p2, tr_p2, in_p2 = jax.block_until_ready(
        tiled_fwd(transition_w2, emission_w2, init_w2))
    assert jnp.allclose(em_p2, jax.nn.log_softmax(emission_w2.T, axis=0), atol=1e-4)
    assert jnp.allclose(tr_p2, jax.nn.log_softmax(transition_w2, axis=0), atol=1e-4)
    assert jnp.allclose(in_p2, jax.nn.log_softmax(init_w2.T, axis=0), atol=1e-4)

    print("KERNEL_OK")
</pallas_src>

<mosaic_0001>
module attributes {stable_mosaic.version = 11 : i64} {
  func.func @_fused_small_kernel(%arg0: memref<9x8xf32, #tpu.memory_space<vmem>>, %arg1: memref<8x32xf32, #tpu.memory_space<vmem>>, %arg2: memref<9x8xf32, #tpu.memory_space<vmem>>, %arg3: memref<8x32xf32, #tpu.memory_space<vmem>>) attributes {dimension_semantics = [], scalar_prefetch = 0 : i64, scratch_operands = 0 : i64, tpu.core_type = #tpu.core_type<tc>} {
    %c0 = arith.constant 0 : index
    %c0_0 = arith.constant 0 : index
    %0 = vector.load %arg0[%c0, %c0_0] : memref<9x8xf32, #tpu.memory_space<vmem>>, vector<8x8xf32>
    %cst = arith.constant dense<0xFF800000> : vector<8xf32>
    %1 = vector.multi_reduction <maximumf>, %0, %cst [0] : vector<8x8xf32> to vector<8xf32>
    %2 = vector.shape_cast %1 : vector<8xf32> to vector<1x8xf32>
    %3 = vector.broadcast %2 : vector<1x8xf32> to vector<8x8xf32>
    %4 = arith.subf %0, %3 : vector<8x8xf32>
    %5 = math.exp %4 : vector<8x8xf32>
    %cst_1 = arith.constant dense<0.000000e+00> : vector<8xf32>
    %6 = vector.multi_reduction <add>, %5, %cst_1 [0] : vector<8x8xf32> to vector<8xf32>
    %7 = vector.shape_cast %6 : vector<8xf32> to vector<1x8xf32>
    %8 = math.log %7 : vector<1x8xf32>
    %9 = vector.broadcast %8 : vector<1x8xf32> to vector<8x8xf32>
    %10 = arith.subf %4, %9 : vector<8x8xf32>
    %c8 = arith.constant 8 : index
    %c0_2 = arith.constant 0 : index
    %11 = vector.load %arg0[%c8, %c0_2] : memref<9x8xf32, #tpu.memory_space<vmem>>, vector<1x8xf32>
    %cst_3 = arith.constant dense<0xFF800000> : vector<1xf32>
    %12 = vector.multi_reduction <maximumf>, %11, %cst_3 [1] : vector<1x8xf32> to vector<1xf32>
    %13 = vector.shape_cast %12 : vector<1xf32> to vector<1x1xf32>
    %14 = vector.broadcast %13 : vector<1x1xf32> to vector<1x8xf32>
    %15 = arith.subf %11, %14 : vector<1x8xf32>
    %16 = math.exp %15 : vector<1x8xf32>
    %cst_4 = arith.constant dense<0.000000e+00> : vector<1xf32>
    %17 = vector.multi_reduction <add>, %16, %cst_4 [1] : vector<1x8xf32> to vector<1xf32>
    %18 = vector.shape_cast %17 : vector<1xf32> to vector<1x1xf32>
    %19 = math.log %18 : vector<1x1xf32>
    %20 = vector.broadcast %19 : vector<1x1xf32> to vector<1x8xf32>
    %21 = arith.subf %15, %20 : vector<1x8xf32>
    %c0_5 = arith.constant 0 : index
    %c0_6 = arith.constant 0 : index
    %22 = vector.load %arg2[%c0_5, %c0_6] : memref<9x8xf32, #tpu.memory_space<vmem>>, vector<8x8xf32>
    tpu.vector_store %arg2[%c0_5, %c0_6], %10 {strides = array<i32>} : memref<9x8xf32, #tpu.memory_space<vmem>>, vector<8x8xf32>,
    %c8_7 = arith.constant 8 : index
    %c0_8 = arith.constant 0 : index
    %23 = vector.load %arg2[%c8_7, %c0_8] : memref<9x8xf32, #tpu.memory_space<vmem>>, vector<1x8xf32>
    tpu.vector_store %arg2[%c8_7, %c0_8], %21 {strides = array<i32>} : memref<9x8xf32, #tpu.memory_space<vmem>>, vector<1x8xf32>,
    %c0_9 = arith.constant 0 : index
    %c0_10 = arith.constant 0 : index
    %24 = vector.load %arg1[%c0_9, %c0_10] : memref<8x32xf32, #tpu.memory_space<vmem>>, vector<8x32xf32>
    %cst_11 = arith.constant dense<0xFF800000> : vector<8xf32>
    %25 = vector.multi_reduction <maximumf>, %24, %cst_11 [1] : vector<8x32xf32> to vector<8xf32>
    %26 = vector.shape_cast %25 : vector<8xf32> to vector<8x1xf32>
    %27 = vector.broadcast %26 : vector<8x1xf32> to vector<8x32xf32>
    %28 = arith.subf %24, %27 : vector<8x32xf32>
    %29 = math.exp %28 : vector<8x32xf32>
    %cst_12 = arith.constant dense<0.000000e+00> : vector<8xf32>
    %30 = vector.multi_reduction <add>, %29, %cst_12 [1] : vector<8x32xf32> to vector<8xf32>
    %31 = vector.shape_cast %30 : vector<8xf32> to vector<8x1xf32>
    %32 = math.log %31 : vector<8x1xf32>
    %33 = vector.broadcast %32 : vector<8x1xf32> to vector<8x32xf32>
    %34 = arith.subf %28, %33 : vector<8x32xf32>
    %c0_13 = arith.constant 0 : index
    %c0_14 = arith.constant 0 : index
    %35 = vector.load %arg3[%c0_13, %c0_14] : memref<8x32xf32, #tpu.memory_space<vmem>>, vector<8x32xf32>
    tpu.vector_store %arg3[%c0_13, %c0_14], %34 {strides = array<i32>} : memref<8x32xf32, #tpu.memory_space<vmem>>, vector<8x32xf32>,
    return
  }
}

</mosaic_0001>

<llo_original>
// kernel: model_forward.1
$region0: #{model_forward.1}
  #allocation0 [shape = 'u32[]', space=smem, size = 0x4, offset = 0x4, fixed_abs, tag = 'smem constant byte address 0x4 - core index']
  #allocation1 [shape = 'u32[144,128]{1,0:T(1,128)}', space=vmem, size = 0x12000, scoped, tag = 'internal scratch']
  %s0 = inlined_call_operand.vmem [shape: f32[9,8], index: 0, kind: input, shape index: {}]
  %s1 = inlined_call_operand.vmem [shape: f32[8,32], index: 1, kind: input, shape index: {}]
  %s2 = inlined_call_operand.vmem [shape: f32[9,8], index: 2, kind: output, shape index: {0}]
  %s3 = inlined_call_operand.hbm [shape: f32[8,32], index: 3, kind: output, shape index: {1}]
  %4 = xla_tuple %s2, %s3
  %s5 = sld [smem:[#allocation0]]
  $region26: #{model_forward.1} parent=0
    _
  %s7 = ssub.s32 1, %s5
  %s8 = scalar_select 0, %s7, %s5
  $region1: #{model_forward.1} parent=0
    #allocation2 [shape = 'u8[4096]{0}', space=vmem, size = 0x1000, scoped, tag = 'output window, operand 1, single buffered']
    #allocation3 [shape = 's32[1]{0}', space=sflag, size = 0x4, scoped, tag = 'scoped memory for model_forward.1']
    %9 = vsyncpa [#allocation3], 0
    // Predicated region
    $region2: #{model_forward.1} parent=1 // pred_check
      _
    $region3: #{model_forward.1} parent=1 // pred_check_branch
      %11 = sbr.rel (0) target = $region5
    $region4: #{model_forward.1} parent=1 // pred_region
      _
    $region5: #{model_forward.1} parent=1 // pred_fallthru
      _
    // Predicated region
    $region6: #{model_forward.1} parent=1 // pred_check
      _
    $region7: #{model_forward.1} parent=1 // pred_check_branch
      %13 = sbr.rel (0) target = $region9
    $region8: #{model_forward.1} parent=1 // pred_region
      _
    $region9: #{model_forward.1} parent=1 // pred_fallthru
      _
    %v14 = vld [vmem:[%s0] sm:$0xff]
    %vm15 = vcmask 64512
    %v16 = vsel %vm15, %v14, -inf
    %v17 = vrot.slane %v16, 4
    %v18 = vmax.f32 %v16, %v17
    %v19 = vrot.slane %v18, 2
    %v20 = vmax.f32 %v18, %v19
    %v21 = vrot.slane %v20, 1
    %v22 = vmax.f32 %v20, %v21
    %v23 = vsub.f32 %v14, %v22
    %v24 = vmul.f32 %v23, 1.442695
    %v25 = vpow.pop %v24
    %v26 = vsel %vm15, %v25, 0.0
    %v27 = vrot.slane %v26, 4
    %v28 = vadd.f32 %v26, %v27
    %v29 = vrot.slane %v28, 2
    %v30 = vadd.f32 %v28, %v29
    %v31 = vrot.slane %v30, 1
    %v32 = vadd.f32 %v30, %v31
    %v33 = vlog2.pop %v32
    %v34 = vmul.f32 %v33, 0.6931472
    %v35 = vsub.f32 %v23, %v34
    %v36 = vld [vmem:[%s0 + $0x8] sm:$0x1]
    %vm37 = vcmask 57344
    %v38 = vsel %vm37, %v36, -inf
    %39 = vmax.xlane.f32.xlu0 %v38
    %v40 = vpop.xlane.xlu0 %39
    %v41 = vsub.f32 %v36, %v40
    %v42 = vmul.f32 %v41, 1.442695
    %v43 = vpow.pop %v42
    %v44 = vsel %vm37, %v43, 0.0
    %45 = vadd.xlane.f32.xlu0 %v44
    %v46 = vpop.xlane.xlu0 %45
    %v47 = vlog2.pop %v46
    %v48 = vmul.f32 %v47, 0.6931472
    %v49 = vsub.f32 %v41, %v48
    %50 = vst.msk [vmem:[%s2] sm:$0xff] %vm15, %v35
    %51 = vst.msk [vmem:[%s2 + $0x8] sm:$0x1] %vm37, %v49
    %v52 = vld [vmem:[%s1] sm:$0xff]
    %vm53 = vcmask 261120
    %v54 = vsel %vm53, %v52, -inf
    %55 = vmax.xlane.f32.xlu0 %v54
    %v56 = vpop.xlane.xlu0 %55
    %v57 = vsub.f32 %v52, %v56
    %v58 = vmul.f32 %v57, 1.442695
    %v59 = vpow.pop %v58
    %v60 = vsel %vm53, %v59, 0.0
    %61 = vadd.xlane.f32.xlu0 %v60
    %v62 = vpop.xlane.xlu0 %61
    %v63 = vlog2.pop %v62
    %v64 = vmul.f32 %v63, 0.6931472
    %v65 = vsub.f32 %v57, %v64
    %66 = vst.msk [vmem:[#allocation2] sm:$0xff] %vm53, %v65
    // Predicated region
    $region10: #{model_forward.1} parent=1 // pred_check
      _
    $region11: #{model_forward.1} parent=1 // pred_check_branch
      %68 = sbr.rel (0) target = $region13
    $region12: #{model_forward.1} parent=1 // pred_region
      _
    $region13: #{model_forward.1} parent=1 // pred_fallthru
      _
    // Predicated region
    $region14: #{model_forward.1} parent=1 // pred_check
      _
    $region15: #{model_forward.1} parent=1 // pred_check_branch
      %70 = sbr.rel (0) target = $region17
    $region16: #{model_forward.1} parent=1 // pred_region
      %s72 = ssub.s32 128, 128
      %73 = vsyncadd [#allocation3], %s72
      %s75 = sshll.u32 [#allocation2], 4
      %s76 = int_to_ptr.vmem [resolvable:$true] %s75
      %78 = dma.vmem_to_hbm [thread:$0]  %s76, 128, %s3, [#allocation3]
    $region17: #{model_forward.1} parent=1 // pred_fallthru
      _
    // Predicated region
    $region18: #{model_forward.1} parent=1 // pred_check
      _
    $region19: #{model_forward.1} parent=1 // pred_check_branch
      %80 = sbr.rel (0) target = $region21
    $region20: #{model_forward.1} parent=1 // pred_region
      _
    $region21: #{model_forward.1} parent=1 // pred_fallthru
      _
    // Predicated region
    $region22: #{model_forward.1} parent=1 // pred_check
      _
    $region23: #{model_forward.1} parent=1 // pred_check_branch
      %82 = sbr.rel (0) target = $region25
    $region24: #{model_forward.1} parent=1 // pred_region
      %83 = dma.done [#allocation3], 128
    $region25: #{model_forward.1} parent=1 // pred_fallthru
      _
    %84 = vsyncpa [#allocation3], 1

</llo_original>
